<compile_context>
chip_gen: v5e
topology: v5e:2x2
jax: 0.10.0
libtpu: 0.0.40
codegen_flags: <defaults>
</compile_context>

<pallas_src>
import functools

import jax
import jax.numpy as jnp
from jax.experimental import pallas as pl
from jax.experimental.pallas import tpu as pltpu


_DIMS = [13, 32, 64, 128, 32, 2]
_K_PAD = 16      # first-layer input width padded 13 -> 16 (8-multiple K)
_OUT_PAD = 128   # last-layer output padded 2 -> 128 (lane-dense writeback)


def _mlp_kernel(x_ref,
                w1_ref, b1_ref,
                w2_ref, b2_ref,
                w3_ref, b3_ref,
                w4_ref, b4_ref,
                w5_ref, b5_ref,
                o_ref):
    # Hot path: 5 MXU matmuls (bf16 operands, f32 accumulation) + VPU
    # bias-add / ReLU in f32, all fused in VMEM.
    h = jnp.dot(x_ref[...], w1_ref[...],
                preferred_element_type=jnp.float32) + b1_ref[...]
    h = jnp.maximum(h, 0.0)

    h = jnp.dot(h.astype(jnp.bfloat16), w2_ref[...],
                preferred_element_type=jnp.float32) + b2_ref[...]
    h = jnp.maximum(h, 0.0)

    h = jnp.dot(h.astype(jnp.bfloat16), w3_ref[...],
                preferred_element_type=jnp.float32) + b3_ref[...]
    h = jnp.maximum(h, 0.0)

    h = jnp.dot(h.astype(jnp.bfloat16), w4_ref[...],
                preferred_element_type=jnp.float32) + b4_ref[...]
    h = jnp.maximum(h, 0.0)

    y = jnp.dot(h.astype(jnp.bfloat16), w5_ref[...],
                preferred_element_type=jnp.float32) + b5_ref[...]
    o_ref[...] = y.astype(o_ref.dtype)


def _round_up(n, m):
    return ((n + m - 1) // m) * m


def _prepare_params(params):
    """One-time pad + cast: W1 K 13->16, W5/b5 out 2->128, weights -> bf16."""
    (w1, b1), (w2, b2), (w3, b3), (w4, b4), (w5, b5) = params
    w1p = jnp.pad(w1, ((0, _K_PAD - w1.shape[0]), (0, 0)))
    w5p = jnp.pad(w5, ((0, 0), (0, _OUT_PAD - w5.shape[1])))
    b5p = jnp.pad(b5, ((0, 0), (0, _OUT_PAD - b5.shape[1])))
    prepared = [(w1p, b1), (w2, b2), (w3, b3), (w4, b4), (w5p, b5p)]
    return [(w.astype(jnp.bfloat16), b.astype(jnp.float32)) for w, b in prepared]


@functools.partial(jax.jit, static_argnames=("tb",))
def nnet_forward(x, params, tb=512):
    """x: (B, 13) float32; params: list of (W, b), W (in, out) f32, b (1, out) f32."""
    B = x.shape[0]
    prepared = _prepare_params(params)

    # Large batch tile for pipelining / MXU streaming, clipped for tiny batches.
    tb = min(tb, _round_up(B, 8))
    b_pad = _round_up(B, tb)
    grid = (b_pad // tb,)

    # Pad batch to a tile multiple, features 13 -> 16, and pre-cast x to bf16.
    x_p = jnp.pad(x, ((0, b_pad - B), (0, _K_PAD - x.shape[1]))).astype(jnp.bfloat16)

    flat = [x_p]
    in_specs = [pl.BlockSpec((tb, _K_PAD), lambda i: (i, 0))]
    for w, b in prepared:
        flat += [w, b]
        # Constant index_map -> weights/biases DMA'd once, VMEM-resident.
        in_specs += [pl.BlockSpec(w.shape, lambda i: (0, 0)),
                     pl.BlockSpec(b.shape, lambda i: (0, 0))]

    out = pl.pallas_call(
        _mlp_kernel,
        out_shape=jax.ShapeDtypeStruct((b_pad, _OUT_PAD), jnp.float32),
        grid=grid,
        in_specs=in_specs,
        out_specs=pl.BlockSpec((tb, _OUT_PAD), lambda i: (i, 0)),
        compiler_params=pltpu.CompilerParams(
            dimension_semantics=("parallel",)),
    )(*flat)

    # Drop batch padding and the lane padding of the 2-wide logits.
    return out[:B, :_DIMS[-1]]


def init_params(key):
    """Deterministic init matching nn.Linear shapes (stored as (in, out))."""
    params = []
    for i in range(len(_DIMS) - 1):
        fan_in, fan_out = _DIMS[i], _DIMS[i + 1]
        key, kw, kb = jax.random.split(key, 3)
        bound = 1.0 / (fan_in ** 0.5)  # PyTorch Linear default uniform bound
        w = jax.random.uniform(kw, (fan_in, fan_out), jnp.float32, -bound, bound)
        b = jax.random.uniform(kb, (1, fan_out), jnp.float32, -bound, bound)
        params.append((w, b))
    return params


def _reference_f32(x, params):
    h = x
    for i, (w, b) in enumerate(params):
        h = h @ w + b
        if i < len(params) - 1:
            h = jnp.maximum(h, 0.0)
    return h


def _reference_bf16(x, params):
    """Mirrors kernel arithmetic: bf16 matmul operands, f32 accumulation/bias/ReLU."""
    h = x.astype(jnp.bfloat16)
    out = None
    for i, (w, b) in enumerate(params):
        acc = jnp.dot(h, w.astype(jnp.bfloat16),
                      preferred_element_type=jnp.float32) + b
        if i < len(params) - 1:
            acc = jnp.maximum(acc, 0.0)
            h = acc.astype(jnp.bfloat16)
        else:
            out = acc
    return out


if __name__ == "__main__":
    key = jax.random.PRNGKey(0)
    key, kx = jax.random.split(key)
    batch = 8
    x = jax.random.normal(kx, (batch, 13), jnp.float32)

    params = init_params(key)

    y = nnet_forward(x, params)
    jax.block_until_ready(y)
    assert y.shape == (batch, 2)

    y_bf16 = _reference_bf16(x, params)
    y_f32 = _reference_f32(x, params)
    assert jnp.allclose(y, y_bf16, atol=2e-3, rtol=2e-3), "mismatch vs bf16 reference"
    assert jnp.allclose(y, y_f32, atol=5e-2, rtol=5e-2), "mismatch vs f32 reference"

    print("KERNEL_OK")
</pallas_src>

<mosaic_0001>
module attributes {stable_mosaic.version = 11 : i64} {
  func.func @_mlp_kernel(%arg0: i32, %arg1: memref<8x16xbf16, #tpu.memory_space<vmem>>, %arg2: memref<16x32xbf16, #tpu.memory_space<vmem>>, %arg3: memref<1x32xf32, #tpu.memory_space<vmem>>, %arg4: memref<32x64xbf16, #tpu.memory_space<vmem>>, %arg5: memref<1x64xf32, #tpu.memory_space<vmem>>, %arg6: memref<64x128xbf16, #tpu.memory_space<vmem>>, %arg7: memref<1x128xf32, #tpu.memory_space<vmem>>, %arg8: memref<128x32xbf16, #tpu.memory_space<vmem>>, %arg9: memref<1x32xf32, #tpu.memory_space<vmem>>, %arg10: memref<32x128xbf16, #tpu.memory_space<vmem>>, %arg11: memref<1x128xf32, #tpu.memory_space<vmem>>, %arg12: memref<8x128xf32, #tpu.memory_space<vmem>>) attributes {dimension_semantics = [#tpu.dimension_semantics<parallel>], iteration_bounds = array<i64: 1>, scalar_prefetch = 0 : i64, scratch_operands = 0 : i64, tpu.core_type = #tpu.core_type<tc>, window_params = [{transform_indices = @transform_0, window_bounds = array<i64: 8, 16>}, {pipeline_mode = #tpu.pipeline_mode<synchronous>, transform_indices = @transform_1, window_bounds = array<i64: 16, 32>}, {pipeline_mode = #tpu.pipeline_mode<synchronous>, transform_indices = @transform_2, window_bounds = array<i64: 1, 32>}, {pipeline_mode = #tpu.pipeline_mode<synchronous>, transform_indices = @transform_3, window_bounds = array<i64: 32, 64>}, {pipeline_mode = #tpu.pipeline_mode<synchronous>, transform_indices = @transform_4, window_bounds = array<i64: 1, 64>}, {pipeline_mode = #tpu.pipeline_mode<synchronous>, transform_indices = @transform_5, window_bounds = array<i64: 64, 128>}, {pipeline_mode = #tpu.pipeline_mode<synchronous>, transform_indices = @transform_6, window_bounds = array<i64: 1, 128>}, {pipeline_mode = #tpu.pipeline_mode<synchronous>, transform_indices = @transform_7, window_bounds = array<i64: 128, 32>}, {pipeline_mode = #tpu.pipeline_mode<synchronous>, transform_indices = @transform_8, window_bounds = array<i64: 1, 32>}, {pipeline_mode = #tpu.pipeline_mode<synchronous>, transform_indices = @transform_9, window_bounds = array<i64: 32, 128>}, {pipeline_mode = #tpu.pipeline_mode<synchronous>, transform_indices = @transform_10, window_bounds = array<i64: 1, 128>}, {transform_indices = @transform_11, window_bounds = array<i64: 8, 128>}]} {
    %c0 = arith.constant 0 : index
    %c0_0 = arith.constant 0 : index
    %0 = vector.load %arg1[%c0, %c0_0] : memref<8x16xbf16, #tpu.memory_space<vmem>>, vector<8x16xbf16>
    %c0_1 = arith.constant 0 : index
    %c0_2 = arith.constant 0 : index
    %1 = vector.load %arg2[%c0_1, %c0_2] : memref<16x32xbf16, #tpu.memory_space<vmem>>, vector<16x32xbf16>
    %cst = arith.constant dense<0.000000e+00> : vector<8x32xf32>
    %2 = tpu.matmul %0, %1, %cst {dimension_numbers = #tpu.dot_dimension_numbers<[1], [0], [0], [1], [0, 0, 1, 1], [], []>} : vector<8x16xbf16>, vector<16x32xbf16>, vector<8x32xf32> -> vector<8x32xf32>
    %c0_3 = arith.constant 0 : index
    %c0_4 = arith.constant 0 : index
    %3 = vector.load %arg3[%c0_3, %c0_4] : memref<1x32xf32, #tpu.memory_space<vmem>>, vector<1x32xf32>
    %4 = vector.broadcast %3 : vector<1x32xf32> to vector<8x32xf32>
    %5 = arith.addf %2, %4 : vector<8x32xf32>
    %cst_5 = arith.constant 0.000000e+00 : f32
    %6 = vector.broadcast %cst_5 : f32 to vector<8x32xf32>
    %7 = arith.maximumf %5, %6 : vector<8x32xf32>
    %8 = arith.truncf %7 : vector<8x32xf32> to vector<8x32xbf16>
    %c0_6 = arith.constant 0 : index
    %c0_7 = arith.constant 0 : index
    %9 = vector.load %arg4[%c0_6, %c0_7] : memref<32x64xbf16, #tpu.memory_space<vmem>>, vector<32x64xbf16>
    %cst_8 = arith.constant dense<0.000000e+00> : vector<8x64xf32>
    %10 = tpu.matmul %8, %9, %cst_8 {dimension_numbers = #tpu.dot_dimension_numbers<[1], [0], [0], [1], [0, 0, 1, 1], [], []>} : vector<8x32xbf16>, vector<32x64xbf16>, vector<8x64xf32> -> vector<8x64xf32>
    %c0_9 = arith.constant 0 : index
    %c0_10 = arith.constant 0 : index
    %11 = vector.load %arg5[%c0_9, %c0_10] : memref<1x64xf32, #tpu.memory_space<vmem>>, vector<1x64xf32>
    %12 = vector.broadcast %11 : vector<1x64xf32> to vector<8x64xf32>
    %13 = arith.addf %10, %12 : vector<8x64xf32>
    %cst_11 = arith.constant 0.000000e+00 : f32
    %14 = vector.broadcast %cst_11 : f32 to vector<8x64xf32>
    %15 = arith.maximumf %13, %14 : vector<8x64xf32>
    %16 = arith.truncf %15 : vector<8x64xf32> to vector<8x64xbf16>
    %c0_12 = arith.constant 0 : index
    %c0_13 = arith.constant 0 : index
    %17 = vector.load %arg6[%c0_12, %c0_13] : memref<64x128xbf16, #tpu.memory_space<vmem>>, vector<64x128xbf16>
    %cst_14 = arith.constant dense<0.000000e+00> : vector<8x128xf32>
    %18 = tpu.matmul %16, %17, %cst_14 {dimension_numbers = #tpu.dot_dimension_numbers<[1], [0], [0], [1], [0, 0, 1, 1], [], []>} : vector<8x64xbf16>, vector<64x128xbf16>, vector<8x128xf32> -> vector<8x128xf32>
    %c0_15 = arith.constant 0 : index
    %c0_16 = arith.constant 0 : index
    %19 = vector.load %arg7[%c0_15, %c0_16] : memref<1x128xf32, #tpu.memory_space<vmem>>, vector<1x128xf32>
    %20 = vector.broadcast %19 : vector<1x128xf32> to vector<8x128xf32>
    %21 = arith.addf %18, %20 : vector<8x128xf32>
    %cst_17 = arith.constant 0.000000e+00 : f32
    %22 = vector.broadcast %cst_17 : f32 to vector<8x128xf32>
    %23 = arith.maximumf %21, %22 : vector<8x128xf32>
    %24 = arith.truncf %23 : vector<8x128xf32> to vector<8x128xbf16>
    %c0_18 = arith.constant 0 : index
    %c0_19 = arith.constant 0 : index
    %25 = vector.load %arg8[%c0_18, %c0_19] : memref<128x32xbf16, #tpu.memory_space<vmem>>, vector<128x32xbf16>
    %cst_20 = arith.constant dense<0.000000e+00> : vector<8x32xf32>
    %26 = tpu.matmul %24, %25, %cst_20 {dimension_numbers = #tpu.dot_dimension_numbers<[1], [0], [0], [1], [0, 0, 1, 1], [], []>} : vector<8x128xbf16>, vector<128x32xbf16>, vector<8x32xf32> -> vector<8x32xf32>
    %c0_21 = arith.constant 0 : index
    %c0_22 = arith.constant 0 : index
    %27 = vector.load %arg9[%c0_21, %c0_22] : memref<1x32xf32, #tpu.memory_space<vmem>>, vector<1x32xf32>
    %28 = vector.broadcast %27 : vector<1x32xf32> to vector<8x32xf32>
    %29 = arith.addf %26, %28 : vector<8x32xf32>
    %cst_23 = arith.constant 0.000000e+00 : f32
    %30 = vector.broadcast %cst_23 : f32 to vector<8x32xf32>
    %31 = arith.maximumf %29, %30 : vector<8x32xf32>
    %32 = arith.truncf %31 : vector<8x32xf32> to vector<8x32xbf16>
    %c0_24 = arith.constant 0 : index
    %c0_25 = arith.constant 0 : index
    %33 = vector.load %arg10[%c0_24, %c0_25] : memref<32x128xbf16, #tpu.memory_space<vmem>>, vector<32x128xbf16>
    %cst_26 = arith.constant dense<0.000000e+00> : vector<8x128xf32>
    %34 = tpu.matmul %32, %33, %cst_26 {dimension_numbers = #tpu.dot_dimension_numbers<[1], [0], [0], [1], [0, 0, 1, 1], [], []>} : vector<8x32xbf16>, vector<32x128xbf16>, vector<8x128xf32> -> vector<8x128xf32>
    %c0_27 = arith.constant 0 : index
    %c0_28 = arith.constant 0 : index
    %35 = vector.load %arg11[%c0_27, %c0_28] : memref<1x128xf32, #tpu.memory_space<vmem>>, vector<1x128xf32>
    %36 = vector.broadcast %35 : vector<1x128xf32> to vector<8x128xf32>
    %37 = arith.addf %34, %36 : vector<8x128xf32>
    %c0_29 = arith.constant 0 : index
    %c0_30 = arith.constant 0 : index
    %38 = vector.load %arg12[%c0_29, %c0_30] : memref<8x128xf32, #tpu.memory_space<vmem>>, vector<8x128xf32>
    tpu.vector_store %arg12[%c0_29, %c0_30], %37 {strides = array<i32>} : memref<8x128xf32, #tpu.memory_space<vmem>>, vector<8x128xf32>,
    return
  }
  func.func @transform_0(%arg0: i32) -> (i32, i32) {
    %c0_i32 = arith.constant 0 : i32
    %c0_i32_0 = arith.constant 0 : i32
    return %arg0, %c0_i32 : i32, i32
  }
  func.func @transform_1(%arg0: i32) -> (i32, i32) {
    %c0_i32 = arith.constant 0 : i32
    %c0_i32_0 = arith.constant 0 : i32
    %c0_i32_1 = arith.constant 0 : i32
    return %c0_i32, %c0_i32_0 : i32, i32
  }
  func.func @transform_2(%arg0: i32) -> (i32, i32) {
    %c0_i32 = arith.constant 0 : i32
    %c0_i32_0 = arith.constant 0 : i32
    %c0_i32_1 = arith.constant 0 : i32
    return %c0_i32, %c0_i32_0 : i32, i32
  }
  func.func @transform_3(%arg0: i32) -> (i32, i32) {
    %c0_i32 = arith.constant 0 : i32
    %c0_i32_0 = arith.constant 0 : i32
    %c0_i32_1 = arith.constant 0 : i32
    return %c0_i32, %c0_i32_0 : i32, i32
  }
  func.func @transform_4(%arg0: i32) -> (i32, i32) {
    %c0_i32 = arith.constant 0 : i32
    %c0_i32_0 = arith.constant 0 : i32
    %c0_i32_1 = arith.constant 0 : i32
    return %c0_i32, %c0_i32_0 : i32, i32
  }
  func.func @transform_5(%arg0: i32) -> (i32, i32) {
    %c0_i32 = arith.constant 0 : i32
    %c0_i32_0 = arith.constant 0 : i32
    %c0_i32_1 = arith.constant 0 : i32
    return %c0_i32, %c0_i32_0 : i32, i32
  }
  func.func @transform_6(%arg0: i32) -> (i32, i32) {
    %c0_i32 = arith.constant 0 : i32
    %c0_i32_0 = arith.constant 0 : i32
    %c0_i32_1 = arith.constant 0 : i32
    return %c0_i32, %c0_i32_0 : i32, i32
  }
  func.func @transform_7(%arg0: i32) -> (i32, i32) {
    %c0_i32 = arith.constant 0 : i32
    %c0_i32_0 = arith.constant 0 : i32
    %c0_i32_1 = arith.constant 0 : i32
    return %c0_i32, %c0_i32_0 : i32, i32
  }
  func.func @transform_8(%arg0: i32) -> (i32, i32) {
    %c0_i32 = arith.constant 0 : i32
    %c0_i32_0 = arith.constant 0 : i32
    %c0_i32_1 = arith.constant 0 : i32
    return %c0_i32, %c0_i32_0 : i32, i32
  }
  func.func @transform_9(%arg0: i32) -> (i32, i32) {
    %c0_i32 = arith.constant 0 : i32
    %c0_i32_0 = arith.constant 0 : i32
    %c0_i32_1 = arith.constant 0 : i32
    return %c0_i32, %c0_i32_0 : i32, i32
  }
  func.func @transform_10(%arg0: i32) -> (i32, i32) {
    %c0_i32 = arith.constant 0 : i32
    %c0_i32_0 = arith.constant 0 : i32
    %c0_i32_1 = arith.constant 0 : i32
    return %c0_i32, %c0_i32_0 : i32, i32
  }
  func.func @transform_11(%arg0: i32) -> (i32, i32) {
    %c0_i32 = arith.constant 0 : i32
    %c0_i32_0 = arith.constant 0 : i32
    return %arg0, %c0_i32 : i32, i32
  }
}

</mosaic_0001>

<llo_original>
// kernel: nnet_forward.1
$region0: #{nnet_forward.1}
  #allocation0 [shape = 'u32[]', space=smem, size = 0x4, offset = 0x4, fixed_abs, tag = 'smem constant byte address 0x4 - core index']
  #allocation1 [shape = 'u32[72,128]{1,0:T(1,128)}', space=vmem, size = 0x9000, scoped, tag = 'internal scratch']
  %s0 = inlined_call_operand.vmem [shape: bf16[8,16], index: 0, kind: input, shape index: {}]
  %s1 = inlined_call_operand.vmem [shape: bf16[16,32], index: 1, kind: input, shape index: {}]
  %s2 = inlined_call_operand.vmem [shape: f32[1,32], index: 2, kind: input, shape index: {}]
  %s3 = inlined_call_operand.vmem [shape: bf16[32,64], index: 3, kind: input, shape index: {}]
  %s4 = inlined_call_operand.vmem [shape: f32[1,64], index: 4, kind: input, shape index: {}]
  %s5 = inlined_call_operand.vmem [shape: bf16[64,128], index: 5, kind: input, shape index: {}]
  %s6 = inlined_call_operand.vmem [shape: f32[1,128], index: 6, kind: input, shape index: {}]
  %s7 = inlined_call_operand.vmem [shape: bf16[128,32], index: 7, kind: input, shape index: {}]
  %s8 = inlined_call_operand.vmem [shape: f32[1,32], index: 8, kind: input, shape index: {}]
  %s9 = inlined_call_operand.vmem [shape: bf16[32,128], index: 9, kind: input, shape index: {}]
  %s10 = inlined_call_operand.vmem [shape: f32[1,128], index: 10, kind: input, shape index: {}]
  %s11 = inlined_call_operand.vmem [shape: f32[8,128], index: 11, kind: output, shape index: {}]
  %s12 = sld [smem:[#allocation0]]
  $region54: #{nnet_forward.1} parent=0
    _
  %s14 = ssub.s32 1, %s12
  %s15 = scalar_select 0, %s14, %s12
  // Predicated region
  $region2: #{nnet_forward.1} parent=0 // pred_check
    _
  $region3: #{nnet_forward.1} parent=0 // pred_check_branch
    %17 = sbr.rel (0) target = $region5
  $region4: #{nnet_forward.1} parent=0 // pred_region
    _
  $region5: #{nnet_forward.1} parent=0 // pred_fallthru
    _
  // Predicated region
  $region6: #{nnet_forward.1} parent=0 // pred_check
    _
  $region7: #{nnet_forward.1} parent=0 // pred_check_branch
    %19 = sbr.rel (0) target = $region9
  $region8: #{nnet_forward.1} parent=0 // pred_region
    _
  $region9: #{nnet_forward.1} parent=0 // pred_fallthru
    _
  // Predicated region
  $region10: #{nnet_forward.1} parent=0 // pred_check
    _
  $region11: #{nnet_forward.1} parent=0 // pred_check_branch
    %21 = sbr.rel (0) target = $region13
  $region12: #{nnet_forward.1} parent=0 // pred_region
    _
  $region13: #{nnet_forward.1} parent=0 // pred_fallthru
    _
  // Predicated region
  $region14: #{nnet_forward.1} parent=0 // pred_check
    _
  $region15: #{nnet_forward.1} parent=0 // pred_check_branch
    %23 = sbr.rel (0) target = $region17
  $region16: #{nnet_forward.1} parent=0 // pred_region
    _
  $region17: #{nnet_forward.1} parent=0 // pred_fallthru
    _
  // Predicated region
  $region18: #{nnet_forward.1} parent=0 // pred_check
    _
  $region19: #{nnet_forward.1} parent=0 // pred_check_branch
    %25 = sbr.rel (0) target = $region21
  $region20: #{nnet_forward.1} parent=0 // pred_region
    _
  $region21: #{nnet_forward.1} parent=0 // pred_fallthru
    _
  // Predicated region
  $region22: #{nnet_forward.1} parent=0 // pred_check
    _
  $region23: #{nnet_forward.1} parent=0 // pred_check_branch
    %27 = sbr.rel (0) target = $region25
  $region24: #{nnet_forward.1} parent=0 // pred_region
    _
  $region25: #{nnet_forward.1} parent=0 // pred_fallthru
    _
  // Predicated region
  $region26: #{nnet_forward.1} parent=0 // pred_check
    _
  $region27: #{nnet_forward.1} parent=0 // pred_check_branch
    %29 = sbr.rel (0) target = $region29
  $region28: #{nnet_forward.1} parent=0 // pred_region
    _
  $region29: #{nnet_forward.1} parent=0 // pred_fallthru
    _
  // Predicated region
  $region30: #{nnet_forward.1} parent=0 // pred_check
    _
  $region31: #{nnet_forward.1} parent=0 // pred_check_branch
    %31 = sbr.rel (0) target = $region33
  $region32: #{nnet_forward.1} parent=0 // pred_region
    _
  $region33: #{nnet_forward.1} parent=0 // pred_fallthru
    _
  // Predicated region
  $region34: #{nnet_forward.1} parent=0 // pred_check
    _
  $region35: #{nnet_forward.1} parent=0 // pred_check_branch
    %33 = sbr.rel (0) target = $region37
  $region36: #{nnet_forward.1} parent=0 // pred_region
    _
  $region37: #{nnet_forward.1} parent=0 // pred_fallthru
    _
  // Predicated region
  $region38: #{nnet_forward.1} parent=0 // pred_check
    _
  $region39: #{nnet_forward.1} parent=0 // pred_check_branch
    %35 = sbr.rel (0) target = $region41
  $region40: #{nnet_forward.1} parent=0 // pred_region
    _
  $region41: #{nnet_forward.1} parent=0 // pred_fallthru
    _
  // Predicated region
  $region42: #{nnet_forward.1} parent=0 // pred_check
    _
  $region43: #{nnet_forward.1} parent=0 // pred_check_branch
    %37 = sbr.rel (0) target = $region45
  $region44: #{nnet_forward.1} parent=0 // pred_region
    _
  $region45: #{nnet_forward.1} parent=0 // pred_fallthru
    _
  %v39 = vld [vmem:[%s0] sm:$0xf]
  %v40 = vld [vmem:[%s1] sm:$0xf]
  %v41 = vld [vmem:[%s1 + $0x4] sm:$0xf]
  %v42 = vld [vmem:[%s2] sm:$0x1]
  %v44 = vperm.slane %v42, 0
  %v48 = vunpack.c.l.b16 %v40
  %v49 = vunpack.c.l.b16 %v41
  %v50 = vpack.c.b16 %v49, %v48
  %vm52 = vcmask 130048
  %v54 = vsel %vm52, %v39, 0
  %56 = vmatpush.bf16.msra.mxu0 0
  %57 = vmatpush.bf16.msra.mxu0 0
  %58 = vmatpush.bf16.msra.mxu0 0
  %59 = vmatpush.bf16.msra.mxu0 0
  %60 = vmatpush.bf16.msra.mxu0 0
  %61 = vmatpush.bf16.msra.mxu0 0
  %62 = vmatpush.bf16.msra.mxu0 0
  %63 = vmatpush.bf16.msra.mxu0 %v50
  %64 = vmatmul.bf16.gmra.mxu0 %v54
  %v65 = vpop.f32.mrf.mxu0
  %v66 = vadd.f32 %v44, %v65
  %v67 = vpop.f32.mrf.mxu0
  %68 = vdwg.mxu0
  %v69 = vmax.f32 %v66, 0.0
  %v70 = vpack.c.bf16 %v69, %v69
  %v71 = vld [vmem:[%s3] sm:$0xf]
  %v72 = vld [vmem:[%s3 + $0x4] sm:$0xf]
  %v73 = vld [vmem:[%s3 + $0x8] sm:$0xf]
  %v74 = vld [vmem:[%s3 + $0xc] sm:$0xf]
  %v75 = vld [vmem:[%s4] sm:$0x1]
  %v77 = vperm.slane %v75, 0
  %v83 = vunpack.c.l.b16 %v71
  %v84 = vunpack.c.l.b16 %v72
  %v85 = vunpack.c.l.b16 %v73
  %v86 = vunpack.c.l.b16 %v74
  %v87 = vpack.c.b16 %v84, %v83
  %v88 = vpack.c.b16 %v86, %v85
  %vm91 = vcmask 261120
  %v93 = vsel %vm91, %v70, 0
  %95 = vmatpush.bf16.msra.mxu0 0
  %96 = vmatpush.bf16.msra.mxu0 0
  %97 = vmatpush.bf16.msra.mxu0 0
  %98 = vmatpush.bf16.msra.mxu0 0
  %99 = vmatpush.bf16.msra.mxu0 0
  %100 = vmatpush.bf16.msra.mxu0 0
  %101 = vmatpush.bf16.msra.mxu0 %v88
  %102 = vmatpush.bf16.msra.mxu0 %v87
  %103 = vmatmul.bf16.gmra.mxu0 %v93
  %v104 = vpop.f32.mrf.mxu0
  %v105 = vadd.f32 %v77, %v104
  %v106 = vpop.f32.mrf.mxu0
  %107 = vdwg.mxu0
  %v108 = vmax.f32 %v105, 0.0
  %v109 = vpack.c.bf16 %v108, %v108
  %v110 = vld [vmem:[%s5] sm:$0xf]
  %v111 = vld [vmem:[%s5 + $0x4] sm:$0xf]
  %v112 = vld [vmem:[%s5 + $0x8] sm:$0xf]
  %v113 = vld [vmem:[%s5 + $0xc] sm:$0xf]
  %v114 = vld [vmem:[%s5 + $0x10] sm:$0xf]
  %v115 = vld [vmem:[%s5 + $0x14] sm:$0xf]
  %v116 = vld [vmem:[%s5 + $0x18] sm:$0xf]
  %v117 = vld [vmem:[%s5 + $0x1c] sm:$0xf]
  %v118 = vld [vmem:[%s6] sm:$0x1]
  %v120 = vperm.slane %v118, 0
  %v130 = vunpack.c.l.b16 %v110
  %v131 = vunpack.c.l.b16 %v111
  %v132 = vunpack.c.l.b16 %v112
  %v133 = vunpack.c.l.b16 %v113
  %v134 = vunpack.c.l.b16 %v114
  %v135 = vunpack.c.l.b16 %v115
  %v136 = vunpack.c.l.b16 %v116
  %v137 = vunpack.c.l.b16 %v117
  %v138 = vpack.c.b16 %v131, %v130
  %v139 = vpack.c.b16 %v133, %v132
  %v140 = vpack.c.b16 %v135, %v134
  %v141 = vpack.c.b16 %v137, %v136
  %vm146 = vcmask 523264
  %v148 = vsel %vm146, %v109, 0
  %150 = vmatpush.bf16.msra.mxu0 0
  %151 = vmatpush.bf16.msra.mxu0 0
  %152 = vmatpush.bf16.msra.mxu0 0
  %153 = vmatpush.bf16.msra.mxu0 0
  %154 = vmatpush.bf16.msra.mxu0 %v141
  %155 = vmatpush.bf16.msra.mxu0 %v140
  %156 = vmatpush.bf16.msra.mxu0 %v139
  %157 = vmatpush.bf16.msra.mxu0 %v138
  %158 = vmatmul.bf16.gmra.mxu0 %v148
  %v159 = vpop.f32.mrf.mxu0
  %v160 = vadd.f32 %v120, %v159
  %v161 = vpop.f32.mrf.mxu0
  %162 = vdwg.mxu0
  %v163 = vmax.f32 %v160, 0.0
  %v164 = vpack.c.bf16 %v163, %v163
  %v165 = vld [vmem:[%s7] sm:$0xf]
  %v166 = vld [vmem:[%s7 + $0x4] sm:$0xf]
  %v167 = vld [vmem:[%s7 + $0x8] sm:$0xf]
  %v168 = vld [vmem:[%s7 + $0xc] sm:$0xf]
  %v169 = vld [vmem:[%s7 + $0x10] sm:$0xf]
  %v170 = vld [vmem:[%s7 + $0x14] sm:$0xf]
  %v171 = vld [vmem:[%s7 + $0x18] sm:$0xf]
  %v172 = vld [vmem:[%s7 + $0x1c] sm:$0xf]
  %v173 = vld [vmem:[%s7 + $0x20] sm:$0xf]
  %v174 = vld [vmem:[%s7 + $0x24] sm:$0xf]
  %v175 = vld [vmem:[%s7 + $0x28] sm:$0xf]
  %v176 = vld [vmem:[%s7 + $0x2c] sm:$0xf]
  %v177 = vld [vmem:[%s7 + $0x30] sm:$0xf]
  %v178 = vld [vmem:[%s7 + $0x34] sm:$0xf]
  %v179 = vld [vmem:[%s7 + $0x38] sm:$0xf]
  %v180 = vld [vmem:[%s7 + $0x3c] sm:$0xf]
  %v181 = vld [vmem:[%s8] sm:$0x1]
  %v183 = vperm.slane %v181, 0
  %v201 = vunpack.c.l.b16 %v165
  %v202 = vunpack.c.l.b16 %v166
  %v203 = vunpack.c.l.b16 %v167
  %v204 = vunpack.c.l.b16 %v168
  %v205 = vunpack.c.l.b16 %v169
  %v206 = vunpack.c.l.b16 %v170
  %v207 = vunpack.c.l.b16 %v171
  %v208 = vunpack.c.l.b16 %v172
  %v209 = vunpack.c.l.b16 %v173
  %v210 = vunpack.c.l.b16 %v174
  %v211 = vunpack.c.l.b16 %v175
  %v212 = vunpack.c.l.b16 %v176
  %v213 = vunpack.c.l.b16 %v177
  %v214 = vunpack.c.l.b16 %v178
  %v215 = vunpack.c.l.b16 %v179
  %v216 = vunpack.c.l.b16 %v180
  %v217 = vpack.c.b16 %v202, %v201
  %v218 = vpack.c.b16 %v204, %v203
  %v219 = vpack.c.b16 %v206, %v205
  %v220 = vpack.c.b16 %v208, %v207
  %v221 = vpack.c.b16 %v210, %v209
  %v222 = vpack.c.b16 %v212, %v211
  %v223 = vpack.c.b16 %v214, %v213
  %v224 = vpack.c.b16 %v216, %v215
  %233 = vmatpush.bf16.msra.mxu0 %v224
  %234 = vmatpush.bf16.msra.mxu0 %v223
  %235 = vmatpush.bf16.msra.mxu0 %v222
  %236 = vmatpush.bf16.msra.mxu0 %v221
  %237 = vmatpush.bf16.msra.mxu0 %v220
  %238 = vmatpush.bf16.msra.mxu0 %v219
  %239 = vmatpush.bf16.msra.mxu0 %v218
  %240 = vmatpush.bf16.msra.mxu0 %v217
  %241 = vmatmul.bf16.gmra.mxu0 %v164
  %v242 = vpop.f32.mrf.mxu0
  %v243 = vadd.f32 %v183, %v242
  %v244 = vpop.f32.mrf.mxu0
  %245 = vdwg.mxu0
  %v246 = vmax.f32 %v243, 0.0
  %v247 = vpack.c.bf16 %v246, %v246
  %v248 = vld [vmem:[%s9] sm:$0xf]
  %v249 = vld [vmem:[%s9 + $0x4] sm:$0xf]
  %v250 = vld [vmem:[%s9 + $0x8] sm:$0xf]
  %v251 = vld [vmem:[%s9 + $0xc] sm:$0xf]
  %v252 = vld [vmem:[%s10] sm:$0x1]
  %v254 = vperm.slane %v252, 0
  %v260 = vunpack.c.l.b16 %v248
  %v261 = vunpack.c.l.b16 %v249
  %v262 = vunpack.c.l.b16 %v250
  %v263 = vunpack.c.l.b16 %v251
  %v264 = vpack.c.b16 %v261, %v260
  %v265 = vpack.c.b16 %v263, %v262
  %v269 = vsel %vm91, %v247, 0
  %271 = vmatpush.bf16.msra.mxu0 0
  %272 = vmatpush.bf16.msra.mxu0 0
  %273 = vmatpush.bf16.msra.mxu0 0
  %274 = vmatpush.bf16.msra.mxu0 0
  %275 = vmatpush.bf16.msra.mxu0 0
  %276 = vmatpush.bf16.msra.mxu0 0
  %277 = vmatpush.bf16.msra.mxu0 %v265
  %278 = vmatpush.bf16.msra.mxu0 %v264
  %279 = vmatmul.bf16.gmra.mxu0 %v269
  %v280 = vpop.f32.mrf.mxu0
  %v281 = vadd.f32 %v254, %v280
  %v282 = vpop.f32.mrf.mxu0
  %283 = vdwg.mxu0
  %284 = vst [vmem:[%s11] sm:$0xff] %v281
  // Predicated region
  $region46: #{nnet_forward.1} parent=0 // pred_check
    _
  $region47: #{nnet_forward.1} parent=0 // pred_check_branch
    %286 = sbr.rel (0) target = $region49
  $region48: #{nnet_forward.1} parent=0 // pred_region
    _
  $region49: #{nnet_forward.1} parent=0 // pred_fallthru
    _
  // Predicated region
  $region50: #{nnet_forward.1} parent=0 // pred_check
    _
  $region51: #{nnet_forward.1} parent=0 // pred_check_branch
    %288 = sbr.rel (0) target = $region53
  $region52: #{nnet_forward.1} parent=0 // pred_region
    _
  $region53: #{nnet_forward.1} parent=0 // pred_fallthru
    _

</llo_original>
